<compile_context>
chip_gen: v7x
topology: tpu7x:2x2x1
jax: 0.10.0
libtpu: 0.0.40
codegen_flags: <defaults>
</compile_context>

<pallas_src>
import jax
import jax.numpy as jnp
from jax.experimental import pallas as pl
from jax.experimental.pallas import tpu as pltpu


def _head_kernel(x_ref, w_ref, b_ref, o_ref):
    # x_ref: (Bblk, L, C) tokens    w_ref: (C, CLS_PAD) bf16 (already / HW)
    # b_ref: (1, CLS_PAD) f32       o_ref: (Bblk, CLS_PAD) f32
    # GlobalAvgPool2d numerator: sum over the token (sublane) axis in f32;
    # C stays on the lane axis, so the reduce is dense (no masked lanes).
    pooled_sum = jnp.sum(x_ref[...].astype(jnp.float32), axis=1)       # (Bblk, C)
    # fc on the MXU: bf16 operands, f32 accumulation.  The 1/(H*W) mean scale
    # is pre-folded into w_ref, so this is the full head epilogue.
    out = jnp.dot(pooled_sum.astype(jnp.bfloat16), w_ref[...],
                  preferred_element_type=jnp.float32)                  # (Bblk, CLS_PAD)
    o_ref[...] = (out + b_ref[...]).astype(o_ref.dtype)


def prepare_fc_params(fc_weight, fc_bias, hw):
    """One-time prep (hoisted out of the hot path).

    fc_weight: (classes, C)  PyTorch nn.Linear weight layout
    fc_bias:   (classes,)
    hw:        H*W of the pooled stage (mean scale folded into the weight,
               in f32, before the bf16 cast).
    Returns (w_pad (C, cls_pad) bf16, b_pad (1, cls_pad) f32, classes)."""
    classes, C = fc_weight.shape
    cls_pad = max(128, pl.cdiv(classes, 128) * 128)
    w_scaled = (jnp.transpose(fc_weight).astype(jnp.float32) / float(hw))
    w_pad = jnp.zeros((C, cls_pad), jnp.bfloat16)
    w_pad = w_pad.at[:, :classes].set(w_scaled.astype(jnp.bfloat16))
    b_pad = jnp.zeros((1, cls_pad), jnp.float32)
    b_pad = b_pad.at[:, :classes].set(fc_bias.astype(jnp.float32)[None, :])
    return w_pad, b_pad, classes


def classifier_head(layer4_tokens, w_pad, b_pad, num_classes):
    """layer4_tokens: (B, L, C) last-stage tokens (f32 or bf16; bf16 halves the
                      dominant HBM read — pass it through untouched)
       w_pad:         (C, cls_pad) bf16, prescaled by 1/HW (prepare_fc_params)
       b_pad:         (1, cls_pad) f32
    Returns logits (B, num_classes) float32."""
    B, L, C = layer4_tokens.shape
    cls_pad = w_pad.shape[1]

    # Batch blocking: one block for small B; fixed 32-row blocks otherwise
    # (f32 block: 32*56*768*4 ~= 5.3 MiB after sublane padding; double-buffered
    # input + the tiny (C, 128) weight stays well under every generation's
    # scoped VMEM with the explicit 32 MiB limit below).  Uneven last blocks
    # are handled by Pallas (OOB output rows are masked; each output row only
    # depends on its own input row).
    block_b = B if B <= 32 else 32
    grid = (pl.cdiv(B, block_b),)

    out_padded = pl.pallas_call(
        _head_kernel,
        out_shape=jax.ShapeDtypeStruct((B, cls_pad), jnp.float32),
        grid=grid,
        in_specs=[
            pl.BlockSpec((block_b, L, C), lambda i: (i, 0, 0)),
            pl.BlockSpec((C, cls_pad), lambda i: (0, 0)),
            pl.BlockSpec((1, cls_pad), lambda i: (0, 0)),
        ],
        out_specs=pl.BlockSpec((block_b, cls_pad), lambda i: (i, 0)),
        compiler_params=pltpu.CompilerParams(
            dimension_semantics=("parallel",),
            vmem_limit_bytes=32 * 1024 * 1024,
        ),
    )(layer4_tokens, w_pad, b_pad)

    return out_padded[:, :num_classes]


if __name__ == "__main__":
    # Swin-Tiny: layer4 feature dim = 768; at 224x224 input the last stage is 7x7.
    B, C, H, W = 2, 768, 7, 7
    classes = 10

    key = jax.random.PRNGKey(0)
    k_x, k_w, k_b = jax.random.split(key, 3)

    # Spec-side tensor (NCHW, as adaptive_avg_pool2d sees it) ...
    layer4_nchw = jax.random.normal(k_x, (B, C, H, W), dtype=jnp.float32)
    # ... and the backbone's native pre-permute token layout the kernel consumes.
    layer4_tokens = jnp.transpose(layer4_nchw.reshape(B, C, H * W), (0, 2, 1))

    # deterministic nn.Linear-style params (shapes from __init__: Linear(768, classes))
    fc_weight = jax.random.normal(k_w, (classes, C), dtype=jnp.float32) * 0.02
    fc_bias = jax.random.normal(k_b, (classes,), dtype=jnp.float32) * 0.02

    # One-time parameter prep (hoisted out of the per-call hot path).
    w_pad, b_pad, ncls = prepare_fc_params(fc_weight, fc_bias, H * W)

    logits = classifier_head(layer4_tokens, w_pad, b_pad, ncls)
    logits = jax.block_until_ready(logits)

    # reference (plain JAX, f32) of the exact module semantics:
    #   adaptive_avg_pool2d(layer4, 1).view(B, -1) @ W.T + b
    pooled_ref = jnp.mean(layer4_nchw, axis=(2, 3))
    ref = pooled_ref @ fc_weight.T + fc_bias
    assert logits.shape == (B, classes)
    # bf16 MXU operands with f32 accumulation -> small rounding vs. pure-f32 ref
    assert jnp.allclose(logits, ref, atol=1e-2, rtol=1e-2)

    print("KERNEL_OK")
</pallas_src>

<mosaic_0001>
module attributes {stable_mosaic.version = 11 : i64} {
  func.func @_head_kernel(%arg0: i32, %arg1: memref<2x49x768xf32, #tpu.memory_space<vmem>>, %arg2: memref<768x128xbf16, #tpu.memory_space<vmem>>, %arg3: memref<1x128xf32, #tpu.memory_space<vmem>>, %arg4: memref<2x128xf32, #tpu.memory_space<vmem>>) attributes {dimension_semantics = [#tpu.dimension_semantics<parallel>], iteration_bounds = array<i64: 1>, scalar_prefetch = 0 : i64, scratch_operands = 0 : i64, tpu.core_type = #tpu.core_type<tc>, window_params = [{transform_indices = @transform_0, window_bounds = array<i64: 2, 49, 768>}, {pipeline_mode = #tpu.pipeline_mode<synchronous>, transform_indices = @transform_1, window_bounds = array<i64: 768, 128>}, {pipeline_mode = #tpu.pipeline_mode<synchronous>, transform_indices = @transform_2, window_bounds = array<i64: 1, 128>}, {transform_indices = @transform_3, window_bounds = array<i64: 2, 128>}]} {
    %c0 = arith.constant 0 : index
    %c0_0 = arith.constant 0 : index
    %c0_1 = arith.constant 0 : index
    %0 = vector.load %arg1[%c0, %c0_0, %c0_1] : memref<2x49x768xf32, #tpu.memory_space<vmem>>, vector<2x49x768xf32>
    %cst = arith.constant dense<0.000000e+00> : vector<2x768xf32>
    %1 = vector.multi_reduction <add>, %0, %cst [1] : vector<2x49x768xf32> to vector<2x768xf32>
    %2 = arith.truncf %1 : vector<2x768xf32> to vector<2x768xbf16>
    %c0_2 = arith.constant 0 : index
    %c0_3 = arith.constant 0 : index
    %3 = vector.load %arg2[%c0_2, %c0_3] : memref<768x128xbf16, #tpu.memory_space<vmem>>, vector<768x128xbf16>
    %cst_4 = arith.constant dense<0.000000e+00> : vector<2x128xf32>
    %4 = tpu.matmul %2, %3, %cst_4 {dimension_numbers = #tpu.dot_dimension_numbers<[1], [0], [0], [1], [0, 0, 1, 1], [], []>} : vector<2x768xbf16>, vector<768x128xbf16>, vector<2x128xf32> -> vector<2x128xf32>
    %c0_5 = arith.constant 0 : index
    %c0_6 = arith.constant 0 : index
    %5 = vector.load %arg3[%c0_5, %c0_6] : memref<1x128xf32, #tpu.memory_space<vmem>>, vector<1x128xf32>
    %6 = vector.broadcast %5 : vector<1x128xf32> to vector<2x128xf32>
    %7 = arith.addf %4, %6 : vector<2x128xf32>
    %c0_7 = arith.constant 0 : index
    %c0_8 = arith.constant 0 : index
    %8 = vector.load %arg4[%c0_7, %c0_8] : memref<2x128xf32, #tpu.memory_space<vmem>>, vector<2x128xf32>
    tpu.vector_store %arg4[%c0_7, %c0_8], %7 {strides = array<i32>} : memref<2x128xf32, #tpu.memory_space<vmem>>, vector<2x128xf32>,
    return
  }
  func.func @transform_0(%arg0: i32) -> (i32, i32, i32) {
    %c0_i32 = arith.constant 0 : i32
    %c0_i32_0 = arith.constant 0 : i32
    %c0_i32_1 = arith.constant 0 : i32
    return %arg0, %c0_i32, %c0_i32_0 : i32, i32, i32
  }
  func.func @transform_1(%arg0: i32) -> (i32, i32) {
    %c0_i32 = arith.constant 0 : i32
    %c0_i32_0 = arith.constant 0 : i32
    %c0_i32_1 = arith.constant 0 : i32
    return %c0_i32, %c0_i32_0 : i32, i32
  }
  func.func @transform_2(%arg0: i32) -> (i32, i32) {
    %c0_i32 = arith.constant 0 : i32
    %c0_i32_0 = arith.constant 0 : i32
    %c0_i32_1 = arith.constant 0 : i32
    return %c0_i32, %c0_i32_0 : i32, i32
  }
  func.func @transform_3(%arg0: i32) -> (i32, i32) {
    %c0_i32 = arith.constant 0 : i32
    %c0_i32_0 = arith.constant 0 : i32
    return %arg0, %c0_i32 : i32, i32
  }
}

</mosaic_0001>

<llo_original>
// kernel: tpu_custom_call.1
$region0: #{tpu_custom_call.1}
  #allocation0 [shape = 'u32[]', space=smem, size = 0x4, offset = 0x4, fixed_abs, tag = 'smem constant byte address 0x4 - core index']
  #allocation1 [shape = 'u32[144,128]{1,0:T(1,128)}', space=vmem, size = 0x12000, scoped, tag = 'internal scratch']
  %s0 = inlined_call_operand.vmem [shape: f32[2,49,768], index: 0, kind: input, shape index: {}]
  %s1 = inlined_call_operand.vmem [shape: bf16[768,128], index: 1, kind: input, shape index: {}]
  %s2 = inlined_call_operand.vmem [shape: f32[1,128], index: 2, kind: input, shape index: {}]
  %s3 = inlined_call_operand.hbm [shape: f32[2,128], index: 3, kind: output, shape index: {}]
  %s4 = sld [smem:[#allocation0]]
  $region22: #{tpu_custom_call.1} parent=0
    _
  %s6 = ssub.s32 1, %s4
  %s7 = scalar_select 0, %s6, %s4
  $region1: #{tpu_custom_call.1} parent=0
    #allocation2 [shape = 'u8[1024]{0}', space=vmem, size = 0x400, scoped, tag = 'output window, operand 0, single buffered']
    #allocation3 [shape = 's32[1]{0}', space=sflag, size = 0x4, scoped, tag = 'scoped memory for tpu_custom_call.1']
    %8 = vsyncpa [#allocation3], 0
    // Predicated region
    $region2: #{tpu_custom_call.1} parent=1 // pred_check
      _
    $region3: #{tpu_custom_call.1} parent=1 // pred_check_branch
      %10 = sbr.rel (0) target = $region5
    $region4: #{tpu_custom_call.1} parent=1 // pred_region
      _
    $region5: #{tpu_custom_call.1} parent=1 // pred_fallthru
      _
    // Predicated region
    $region6: #{tpu_custom_call.1} parent=1 // pred_check
      _
    $region7: #{tpu_custom_call.1} parent=1 // pred_check_branch
      %12 = sbr.rel (0) target = $region9
    $region8: #{tpu_custom_call.1} parent=1 // pred_region
      _
    $region9: #{tpu_custom_call.1} parent=1 // pred_fallthru
      _
    // Predicated region
    $region10: #{tpu_custom_call.1} parent=1 // pred_check
      _
    $region11: #{tpu_custom_call.1} parent=1 // pred_check_branch
      %14 = sbr.rel (0) target = $region13
    $region12: #{tpu_custom_call.1} parent=1 // pred_region
      _
    $region13: #{tpu_custom_call.1} parent=1 // pred_fallthru
      _
    %v16 = vld [vmem:[%s0] sm:$0xff]
    %v17 = vld [vmem:[%s0 + $0x8] sm:$0xff]
    %v18 = vld [vmem:[%s0 + $0x10] sm:$0xff]
    %v19 = vld [vmem:[%s0 + $0x18] sm:$0xff]
    %v20 = vld [vmem:[%s0 + $0x20] sm:$0xff]
    %v21 = vld [vmem:[%s0 + $0x28] sm:$0xff]
    %v22 = vld [vmem:[%s0 + $0x30] sm:$0xff]
    %v23 = vld [vmem:[%s0 + $0x38] sm:$0xff]
    %v24 = vld [vmem:[%s0 + $0x40] sm:$0xff]
    %v25 = vld [vmem:[%s0 + $0x48] sm:$0xff]
    %v26 = vld [vmem:[%s0 + $0x50] sm:$0xff]
    %v27 = vld [vmem:[%s0 + $0x58] sm:$0xff]
    %v28 = vld [vmem:[%s0 + $0x60] sm:$0xff]
    %v29 = vld [vmem:[%s0 + $0x68] sm:$0xff]
    %v30 = vld [vmem:[%s0 + $0x70] sm:$0xff]
    %v31 = vld [vmem:[%s0 + $0x78] sm:$0xff]
    %v32 = vld [vmem:[%s0 + $0x80] sm:$0xff]
    %v33 = vld [vmem:[%s0 + $0x88] sm:$0xff]
    %v34 = vld [vmem:[%s0 + $0x90] sm:$0xff]
    %v35 = vld [vmem:[%s0 + $0x98] sm:$0xff]
    %v36 = vld [vmem:[%s0 + $0xa0] sm:$0xff]
    %v37 = vld [vmem:[%s0 + $0xa8] sm:$0xff]
    %v38 = vld [vmem:[%s0 + $0xb0] sm:$0xff]
    %v39 = vld [vmem:[%s0 + $0xb8] sm:$0xff]
    %v40 = vld [vmem:[%s0 + $0xc0] sm:$0xff]
    %v41 = vld [vmem:[%s0 + $0xc8] sm:$0xff]
    %v42 = vld [vmem:[%s0 + $0xd0] sm:$0xff]
    %v43 = vld [vmem:[%s0 + $0xd8] sm:$0xff]
    %v44 = vld [vmem:[%s0 + $0xe0] sm:$0xff]
    %v45 = vld [vmem:[%s0 + $0xe8] sm:$0xff]
    %v46 = vld [vmem:[%s0 + $0xf0] sm:$0xff]
    %v47 = vld [vmem:[%s0 + $0xf8] sm:$0xff]
    %v48 = vld [vmem:[%s0 + $0x100] sm:$0xff]
    %v49 = vld [vmem:[%s0 + $0x108] sm:$0xff]
    %v50 = vld [vmem:[%s0 + $0x110] sm:$0xff]
    %v51 = vld [vmem:[%s0 + $0x118] sm:$0xff]
    %v52 = vld [vmem:[%s0 + $0x120] sm:$0x1]
    %v53 = vld [vmem:[%s0 + $0x128] sm:$0x1]
    %v54 = vld [vmem:[%s0 + $0x130] sm:$0x1]
    %v55 = vld [vmem:[%s0 + $0x138] sm:$0x1]
    %v56 = vld [vmem:[%s0 + $0x140] sm:$0x1]
    %v57 = vld [vmem:[%s0 + $0x148] sm:$0x1]
    %v58 = vld [vmem:[%s0 + $0x150] sm:$0xff]
    %v59 = vld [vmem:[%s0 + $0x158] sm:$0xff]
    %v60 = vld [vmem:[%s0 + $0x160] sm:$0xff]
    %v61 = vld [vmem:[%s0 + $0x168] sm:$0xff]
    %v62 = vld [vmem:[%s0 + $0x170] sm:$0xff]
    %v63 = vld [vmem:[%s0 + $0x178] sm:$0xff]
    %v64 = vld [vmem:[%s0 + $0x180] sm:$0xff]
    %v65 = vld [vmem:[%s0 + $0x188] sm:$0xff]
    %v66 = vld [vmem:[%s0 + $0x190] sm:$0xff]
    %v67 = vld [vmem:[%s0 + $0x198] sm:$0xff]
    %v68 = vld [vmem:[%s0 + $0x1a0] sm:$0xff]
    %v69 = vld [vmem:[%s0 + $0x1a8] sm:$0xff]
    %v70 = vld [vmem:[%s0 + $0x1b0] sm:$0xff]
    %v71 = vld [vmem:[%s0 + $0x1b8] sm:$0xff]
    %v72 = vld [vmem:[%s0 + $0x1c0] sm:$0xff]
    %v73 = vld [vmem:[%s0 + $0x1c8] sm:$0xff]
    %v74 = vld [vmem:[%s0 + $0x1d0] sm:$0xff]
    %v75 = vld [vmem:[%s0 + $0x1d8] sm:$0xff]
    %v76 = vld [vmem:[%s0 + $0x1e0] sm:$0xff]
    %v77 = vld [vmem:[%s0 + $0x1e8] sm:$0xff]
    %v78 = vld [vmem:[%s0 + $0x1f0] sm:$0xff]
    %v79 = vld [vmem:[%s0 + $0x1f8] sm:$0xff]
    %v80 = vld [vmem:[%s0 + $0x200] sm:$0xff]
    %v81 = vld [vmem:[%s0 + $0x208] sm:$0xff]
    %v82 = vld [vmem:[%s0 + $0x210] sm:$0xff]
    %v83 = vld [vmem:[%s0 + $0x218] sm:$0xff]
    %v84 = vld [vmem:[%s0 + $0x220] sm:$0xff]
    %v85 = vld [vmem:[%s0 + $0x228] sm:$0xff]
    %v86 = vld [vmem:[%s0 + $0x230] sm:$0xff]
    %v87 = vld [vmem:[%s0 + $0x238] sm:$0xff]
    %v88 = vld [vmem:[%s0 + $0x240] sm:$0xff]
    %v89 = vld [vmem:[%s0 + $0x248] sm:$0xff]
    %v90 = vld [vmem:[%s0 + $0x250] sm:$0xff]
    %v91 = vld [vmem:[%s0 + $0x258] sm:$0xff]
    %v92 = vld [vmem:[%s0 + $0x260] sm:$0xff]
    %v93 = vld [vmem:[%s0 + $0x268] sm:$0xff]
    %v94 = vld [vmem:[%s0 + $0x270] sm:$0x1]
    %v95 = vld [vmem:[%s0 + $0x278] sm:$0x1]
    %v96 = vld [vmem:[%s0 + $0x280] sm:$0x1]
    %v97 = vld [vmem:[%s0 + $0x288] sm:$0x1]
    %v98 = vld [vmem:[%s0 + $0x290] sm:$0x1]
    %v99 = vld [vmem:[%s0 + $0x298] sm:$0x1]
    %v100 = vadd.f32 %v16, %v22
    %v101 = vadd.f32 %v100, %v28
    %v102 = vadd.f32 %v101, %v34
    %v103 = vadd.f32 %v102, %v40
    %v104 = vadd.f32 %v103, %v46
    %vm105 = vcmask 1040384
    %v106 = vsel %vm105, %v52, 0.0
    %v107 = vadd.f32 %v104, %v106
    %v108 = vrot.slane %v107, 4
    %v109 = vadd.f32 %v107, %v108
    %v110 = vrot.slane %v109, 2
    %v111 = vadd.f32 %v109, %v110
    %v112 = vrot.slane %v111, 1
    %v113 = vadd.f32 %v111, %v112
    %v114 = vadd.f32 %v17, %v23
    %v115 = vadd.f32 %v114, %v29
    %v116 = vadd.f32 %v115, %v35
    %v117 = vadd.f32 %v116, %v41
    %v118 = vadd.f32 %v117, %v47
    %v119 = vsel %vm105, %v53, 0.0
    %v120 = vadd.f32 %v118, %v119
    %v121 = vrot.slane %v120, 4
    %v122 = vadd.f32 %v120, %v121
    %v123 = vrot.slane %v122, 2
    %v124 = vadd.f32 %v122, %v123
    %v125 = vrot.slane %v124, 1
    %v126 = vadd.f32 %v124, %v125
    %v127 = vadd.f32 %v18, %v24
    %v128 = vadd.f32 %v127, %v30
    %v129 = vadd.f32 %v128, %v36
    %v130 = vadd.f32 %v129, %v42
    %v131 = vadd.f32 %v130, %v48
    %v132 = vsel %vm105, %v54, 0.0
    %v133 = vadd.f32 %v131, %v132
    %v134 = vrot.slane %v133, 4
    %v135 = vadd.f32 %v133, %v134
    %v136 = vrot.slane %v135, 2
    %v137 = vadd.f32 %v135, %v136
    %v138 = vrot.slane %v137, 1
    %v139 = vadd.f32 %v137, %v138
    %v140 = vadd.f32 %v19, %v25
    %v141 = vadd.f32 %v140, %v31
    %v142 = vadd.f32 %v141, %v37
    %v143 = vadd.f32 %v142, %v43
    %v144 = vadd.f32 %v143, %v49
    %v145 = vsel %vm105, %v55, 0.0
    %v146 = vadd.f32 %v144, %v145
    %v147 = vrot.slane %v146, 4
    %v148 = vadd.f32 %v146, %v147
    %v149 = vrot.slane %v148, 2
    %v150 = vadd.f32 %v148, %v149
    %v151 = vrot.slane %v150, 1
    %v152 = vadd.f32 %v150, %v151
    %v153 = vadd.f32 %v20, %v26
    %v154 = vadd.f32 %v153, %v32
    %v155 = vadd.f32 %v154, %v38
    %v156 = vadd.f32 %v155, %v44
    %v157 = vadd.f32 %v156, %v50
    %v158 = vsel %vm105, %v56, 0.0
    %v159 = vadd.f32 %v157, %v158
    %v160 = vrot.slane %v159, 4
    %v161 = vadd.f32 %v159, %v160
    %v162 = vrot.slane %v161, 2
    %v163 = vadd.f32 %v161, %v162
    %v164 = vrot.slane %v163, 1
    %v165 = vadd.f32 %v163, %v164
    %v166 = vadd.f32 %v21, %v27
    %v167 = vadd.f32 %v166, %v33
    %v168 = vadd.f32 %v167, %v39
    %v169 = vadd.f32 %v168, %v45
    %v170 = vadd.f32 %v169, %v51
    %v171 = vsel %vm105, %v57, 0.0
    %v172 = vadd.f32 %v170, %v171
    %v173 = vrot.slane %v172, 4
    %v174 = vadd.f32 %v172, %v173
    %v175 = vrot.slane %v174, 2
    %v176 = vadd.f32 %v174, %v175
    %v177 = vrot.slane %v176, 1
    %v178 = vadd.f32 %v176, %v177
    %v179 = vadd.f32 %v58, %v64
    %v180 = vadd.f32 %v179, %v70
    %v181 = vadd.f32 %v180, %v76
    %v182 = vadd.f32 %v181, %v82
    %v183 = vadd.f32 %v182, %v88
    %v184 = vsel %vm105, %v94, 0.0
    %v185 = vadd.f32 %v183, %v184
    %v186 = vrot.slane %v185, 4
    %v187 = vadd.f32 %v185, %v186
    %v188 = vrot.slane %v187, 2
    %v189 = vadd.f32 %v187, %v188
    %v190 = vrot.slane %v189, 1
    %v191 = vadd.f32 %v189, %v190
    %v192 = vadd.f32 %v59, %v65
    %v193 = vadd.f32 %v192, %v71
    %v194 = vadd.f32 %v193, %v77
    %v195 = vadd.f32 %v194, %v83
    %v196 = vadd.f32 %v195, %v89
    %v197 = vsel %vm105, %v95, 0.0
    %v198 = vadd.f32 %v196, %v197
    %v199 = vrot.slane %v198, 4
    %v200 = vadd.f32 %v198, %v199
    %v201 = vrot.slane %v200, 2
    %v202 = vadd.f32 %v200, %v201
    %v203 = vrot.slane %v202, 1
    %v204 = vadd.f32 %v202, %v203
    %v205 = vadd.f32 %v60, %v66
    %v206 = vadd.f32 %v205, %v72
    %v207 = vadd.f32 %v206, %v78
    %v208 = vadd.f32 %v207, %v84
    %v209 = vadd.f32 %v208, %v90
    %v210 = vsel %vm105, %v96, 0.0
    %v211 = vadd.f32 %v209, %v210
    %v212 = vrot.slane %v211, 4
    %v213 = vadd.f32 %v211, %v212
    %v214 = vrot.slane %v213, 2
    %v215 = vadd.f32 %v213, %v214
    %v216 = vrot.slane %v215, 1
    %v217 = vadd.f32 %v215, %v216
    %v218 = vadd.f32 %v61, %v67
    %v219 = vadd.f32 %v218, %v73
    %v220 = vadd.f32 %v219, %v79
    %v221 = vadd.f32 %v220, %v85
    %v222 = vadd.f32 %v221, %v91
    %v223 = vsel %vm105, %v97, 0.0
    %v224 = vadd.f32 %v222, %v223
    %v225 = vrot.slane %v224, 4
    %v226 = vadd.f32 %v224, %v225
    %v227 = vrot.slane %v226, 2
    %v228 = vadd.f32 %v226, %v227
    %v229 = vrot.slane %v228, 1
    %v230 = vadd.f32 %v228, %v229
    %v231 = vadd.f32 %v62, %v68
    %v232 = vadd.f32 %v231, %v74
    %v233 = vadd.f32 %v232, %v80
    %v234 = vadd.f32 %v233, %v86
    %v235 = vadd.f32 %v234, %v92
    %v236 = vsel %vm105, %v98, 0.0
    %v237 = vadd.f32 %v235, %v236
    %v238 = vrot.slane %v237, 4
    %v239 = vadd.f32 %v237, %v238
    %v240 = vrot.slane %v239, 2
    %v241 = vadd.f32 %v239, %v240
    %v242 = vrot.slane %v241, 1
    %v243 = vadd.f32 %v241, %v242
    %v244 = vadd.f32 %v63, %v69
    %v245 = vadd.f32 %v244, %v75
    %v246 = vadd.f32 %v245, %v81
    %v247 = vadd.f32 %v246, %v87
    %v248 = vadd.f32 %v247, %v93
    %v249 = vsel %vm105, %v99, 0.0
    %v250 = vadd.f32 %v248, %v249
    %v251 = vrot.slane %v250, 4
    %v252 = vadd.f32 %v250, %v251
    %v253 = vrot.slane %v252, 2
    %v254 = vadd.f32 %v252, %v253
    %v255 = vrot.slane %v254, 1
    %v256 = vadd.f32 %v254, %v255
    %v257 = vpack.c.bf16 %v113, %v113
    %v258 = vpack.c.bf16 %v126, %v126
    %v259 = vpack.c.bf16 %v139, %v139
    %v260 = vpack.c.bf16 %v152, %v152
    %v261 = vpack.c.bf16 %v165, %v165
    %v262 = vpack.c.bf16 %v178, %v178
    %v263 = vpack.c.bf16 %v191, %v191
    %v264 = vpack.c.bf16 %v204, %v204
    %v265 = vpack.c.bf16 %v217, %v217
    %v266 = vpack.c.bf16 %v230, %v230
    %v267 = vpack.c.bf16 %v243, %v243
    %v268 = vpack.c.bf16 %v256, %v256
    %v269 = vld [vmem:[%s1] sm:$0xf]
    %v270 = vld [vmem:[%s1 + $0x4] sm:$0xf]
    %v271 = vld [vmem:[%s1 + $0x8] sm:$0xf]
    %v272 = vld [vmem:[%s1 + $0xc] sm:$0xf]
    %v273 = vld [vmem:[%s1 + $0x10] sm:$0xf]
    %v274 = vld [vmem:[%s1 + $0x14] sm:$0xf]
    %v275 = vld [vmem:[%s1 + $0x18] sm:$0xf]
    %v276 = vld [vmem:[%s1 + $0x1c] sm:$0xf]
    %v277 = vld [vmem:[%s1 + $0x20] sm:$0xf]
    %v278 = vld [vmem:[%s1 + $0x24] sm:$0xf]
    %v279 = vld [vmem:[%s1 + $0x28] sm:$0xf]
    %v280 = vld [vmem:[%s1 + $0x2c] sm:$0xf]
    %v281 = vld [vmem:[%s1 + $0x30] sm:$0xf]
    %v282 = vld [vmem:[%s1 + $0x34] sm:$0xf]
    %v283 = vld [vmem:[%s1 + $0x38] sm:$0xf]
    %v284 = vld [vmem:[%s1 + $0x3c] sm:$0xf]
    %v285 = vld [vmem:[%s1 + $0x40] sm:$0xf]
    %v286 = vld [vmem:[%s1 + $0x44] sm:$0xf]
    %v287 = vld [vmem:[%s1 + $0x48] sm:$0xf]
    %v288 = vld [vmem:[%s1 + $0x4c] sm:$0xf]
    %v289 = vld [vmem:[%s1 + $0x50] sm:$0xf]
    %v290 = vld [vmem:[%s1 + $0x54] sm:$0xf]
    %v291 = vld [vmem:[%s1 + $0x58] sm:$0xf]
    %v292 = vld [vmem:[%s1 + $0x5c] sm:$0xf]
    %v293 = vld [vmem:[%s1 + $0x60] sm:$0xf]
    %v294 = vld [vmem:[%s1 + $0x64] sm:$0xf]
    %v295 = vld [vmem:[%s1 + $0x68] sm:$0xf]
    %v296 = vld [vmem:[%s1 + $0x6c] sm:$0xf]
    %v297 = vld [vmem:[%s1 + $0x70] sm:$0xf]
    %v298 = vld [vmem:[%s1 + $0x74] sm:$0xf]
    %v299 = vld [vmem:[%s1 + $0x78] sm:$0xf]
    %v300 = vld [vmem:[%s1 + $0x7c] sm:$0xf]
    %v301 = vld [vmem:[%s1 + $0x80] sm:$0xf]
    %v302 = vld [vmem:[%s1 + $0x84] sm:$0xf]
    %v303 = vld [vmem:[%s1 + $0x88] sm:$0xf]
    %v304 = vld [vmem:[%s1 + $0x8c] sm:$0xf]
    %v305 = vld [vmem:[%s1 + $0x90] sm:$0xf]
    %v306 = vld [vmem:[%s1 + $0x94] sm:$0xf]
    %v307 = vld [vmem:[%s1 + $0x98] sm:$0xf]
    %v308 = vld [vmem:[%s1 + $0x9c] sm:$0xf]
    %v309 = vld [vmem:[%s1 + $0xa0] sm:$0xf]
    %v310 = vld [vmem:[%s1 + $0xa4] sm:$0xf]
    %v311 = vld [vmem:[%s1 + $0xa8] sm:$0xf]
    %v312 = vld [vmem:[%s1 + $0xac] sm:$0xf]
    %v313 = vld [vmem:[%s1 + $0xb0] sm:$0xf]
    %v314 = vld [vmem:[%s1 + $0xb4] sm:$0xf]
    %v315 = vld [vmem:[%s1 + $0xb8] sm:$0xf]
    %v316 = vld [vmem:[%s1 + $0xbc] sm:$0xf]
    %v317 = vld [vmem:[%s1 + $0xc0] sm:$0xf]
    %v318 = vld [vmem:[%s1 + $0xc4] sm:$0xf]
    %v319 = vld [vmem:[%s1 + $0xc8] sm:$0xf]
    %v320 = vld [vmem:[%s1 + $0xcc] sm:$0xf]
    %v321 = vld [vmem:[%s1 + $0xd0] sm:$0xf]
    %v322 = vld [vmem:[%s1 + $0xd4] sm:$0xf]
    %v323 = vld [vmem:[%s1 + $0xd8] sm:$0xf]
    %v324 = vld [vmem:[%s1 + $0xdc] sm:$0xf]
    %v325 = vld [vmem:[%s1 + $0xe0] sm:$0xf]
    %v326 = vld [vmem:[%s1 + $0xe4] sm:$0xf]
    %v327 = vld [vmem:[%s1 + $0xe8] sm:$0xf]
    %v328 = vld [vmem:[%s1 + $0xec] sm:$0xf]
    %v329 = vld [vmem:[%s1 + $0xf0] sm:$0xf]
    %v330 = vld [vmem:[%s1 + $0xf4] sm:$0xf]
    %v331 = vld [vmem:[%s1 + $0xf8] sm:$0xf]
    %v332 = vld [vmem:[%s1 + $0xfc] sm:$0xf]
    %v333 = vld [vmem:[%s1 + $0x100] sm:$0xf]
    %v334 = vld [vmem:[%s1 + $0x104] sm:$0xf]
    %v335 = vld [vmem:[%s1 + $0x108] sm:$0xf]
    %v336 = vld [vmem:[%s1 + $0x10c] sm:$0xf]
    %v337 = vld [vmem:[%s1 + $0x110] sm:$0xf]
    %v338 = vld [vmem:[%s1 + $0x114] sm:$0xf]
    %v339 = vld [vmem:[%s1 + $0x118] sm:$0xf]
    %v340 = vld [vmem:[%s1 + $0x11c] sm:$0xf]
    %v341 = vld [vmem:[%s1 + $0x120] sm:$0xf]
    %v342 = vld [vmem:[%s1 + $0x124] sm:$0xf]
    %v343 = vld [vmem:[%s1 + $0x128] sm:$0xf]
    %v344 = vld [vmem:[%s1 + $0x12c] sm:$0xf]
    %v345 = vld [vmem:[%s1 + $0x130] sm:$0xf]
    %v346 = vld [vmem:[%s1 + $0x134] sm:$0xf]
    %v347 = vld [vmem:[%s1 + $0x138] sm:$0xf]
    %v348 = vld [vmem:[%s1 + $0x13c] sm:$0xf]
    %v349 = vld [vmem:[%s1 + $0x140] sm:$0xf]
    %v350 = vld [vmem:[%s1 + $0x144] sm:$0xf]
    %v351 = vld [vmem:[%s1 + $0x148] sm:$0xf]
    %v352 = vld [vmem:[%s1 + $0x14c] sm:$0xf]
    %v353 = vld [vmem:[%s1 + $0x150] sm:$0xf]
    %v354 = vld [vmem:[%s1 + $0x154] sm:$0xf]
    %v355 = vld [vmem:[%s1 + $0x158] sm:$0xf]
    %v356 = vld [vmem:[%s1 + $0x15c] sm:$0xf]
    %v357 = vld [vmem:[%s1 + $0x160] sm:$0xf]
    %v358 = vld [vmem:[%s1 + $0x164] sm:$0xf]
    %v359 = vld [vmem:[%s1 + $0x168] sm:$0xf]
    %v360 = vld [vmem:[%s1 + $0x16c] sm:$0xf]
    %v361 = vld [vmem:[%s1 + $0x170] sm:$0xf]
    %v362 = vld [vmem:[%s1 + $0x174] sm:$0xf]
    %v363 = vld [vmem:[%s1 + $0x178] sm:$0xf]
    %v364 = vld [vmem:[%s1 + $0x17c] sm:$0xf]
    %v365 = vld [vmem:[%s2] sm:$0x1]
    %v367 = vlaneseq
    %v368 = vshrl.u32 %v367, 7
    %v369 = vsub.s32 0, %v368
    %v370 = vrot.slane %v365, %v369
    %v384 = vunpack.c.l.b16 %v257
    %v385 = vunpack.c.l.b16 %v258
    %v386 = vunpack.c.l.b16 %v259
    %v387 = vunpack.c.l.b16 %v260
    %v388 = vunpack.c.l.b16 %v261
    %v389 = vunpack.c.l.b16 %v262
    %v390 = vunpack.c.l.b16 %v263
    %v391 = vunpack.c.l.b16 %v264
    %v392 = vunpack.c.l.b16 %v265
    %v393 = vunpack.c.l.b16 %v266
    %v394 = vunpack.c.l.b16 %v267
    %v395 = vunpack.c.l.b16 %v268
    %vm396 = vcmask 1041409
    %v397 = vsel %vm396, %v390, %v384
    %v398 = vsel %vm396, %v391, %v385
    %v399 = vsel %vm396, %v392, %v386
    %v400 = vsel %vm396, %v393, %v387
    %v401 = vsel %vm396, %v394, %v388
    %v402 = vsel %vm396, %v395, %v389
    %v403 = vpack.c.b16 %v397, %v397
    %v404 = vpack.c.b16 %v398, %v398
    %v405 = vpack.c.b16 %v399, %v399
    %v406 = vpack.c.b16 %v400, %v400
    %v407 = vpack.c.b16 %v401, %v401
    %v408 = vpack.c.b16 %v402, %v402
    %v511 = vunpack.c.l.b16 %v269
    %v512 = vunpack.c.l.b16 %v270
    %v513 = vunpack.c.l.b16 %v271
    %v514 = vunpack.c.l.b16 %v272
    %v515 = vunpack.c.l.b16 %v273
    %v516 = vunpack.c.l.b16 %v274
    %v517 = vunpack.c.l.b16 %v275
    %v518 = vunpack.c.l.b16 %v276
    %v519 = vunpack.c.l.b16 %v277
    %v520 = vunpack.c.l.b16 %v278
    %v521 = vunpack.c.l.b16 %v279
    %v522 = vunpack.c.l.b16 %v280
    %v523 = vunpack.c.l.b16 %v281
    %v524 = vunpack.c.l.b16 %v282
    %v525 = vunpack.c.l.b16 %v283
    %v526 = vunpack.c.l.b16 %v284
    %v527 = vunpack.c.l.b16 %v285
    %v528 = vunpack.c.l.b16 %v286
    %v529 = vunpack.c.l.b16 %v287
    %v530 = vunpack.c.l.b16 %v288
    %v531 = vunpack.c.l.b16 %v289
    %v532 = vunpack.c.l.b16 %v290
    %v533 = vunpack.c.l.b16 %v291
    %v534 = vunpack.c.l.b16 %v292
    %v535 = vunpack.c.l.b16 %v293
    %v536 = vunpack.c.l.b16 %v294
    %v537 = vunpack.c.l.b16 %v295
    %v538 = vunpack.c.l.b16 %v296
    %v539 = vunpack.c.l.b16 %v297
    %v540 = vunpack.c.l.b16 %v298
    %v541 = vunpack.c.l.b16 %v299
    %v542 = vunpack.c.l.b16 %v300
    %v543 = vunpack.c.l.b16 %v301
    %v544 = vunpack.c.l.b16 %v302
    %v545 = vunpack.c.l.b16 %v303
    %v546 = vunpack.c.l.b16 %v304
    %v547 = vunpack.c.l.b16 %v305
    %v548 = vunpack.c.l.b16 %v306
    %v549 = vunpack.c.l.b16 %v307
    %v550 = vunpack.c.l.b16 %v308
    %v551 = vunpack.c.l.b16 %v309
    %v552 = vunpack.c.l.b16 %v310
    %v553 = vunpack.c.l.b16 %v311
    %v554 = vunpack.c.l.b16 %v312
    %v555 = vunpack.c.l.b16 %v313
    %v556 = vunpack.c.l.b16 %v314
    %v557 = vunpack.c.l.b16 %v315
    %v558 = vunpack.c.l.b16 %v316
    %v559 = vunpack.c.l.b16 %v317
    %v560 = vunpack.c.l.b16 %v318
    %v561 = vunpack.c.l.b16 %v319
    %v562 = vunpack.c.l.b16 %v320
    %v563 = vunpack.c.l.b16 %v321
    %v564 = vunpack.c.l.b16 %v322
    %v565 = vunpack.c.l.b16 %v323
    %v566 = vunpack.c.l.b16 %v324
    %v567 = vunpack.c.l.b16 %v325
    %v568 = vunpack.c.l.b16 %v326
    %v569 = vunpack.c.l.b16 %v327
    %v570 = vunpack.c.l.b16 %v328
    %v571 = vunpack.c.l.b16 %v329
    %v572 = vunpack.c.l.b16 %v330
    %v573 = vunpack.c.l.b16 %v331
    %v574 = vunpack.c.l.b16 %v332
    %v575 = vunpack.c.l.b16 %v333
    %v576 = vunpack.c.l.b16 %v334
    %v577 = vunpack.c.l.b16 %v335
    %v578 = vunpack.c.l.b16 %v336
    %v579 = vunpack.c.l.b16 %v337
    %v580 = vunpack.c.l.b16 %v338
    %v581 = vunpack.c.l.b16 %v339
    %v582 = vunpack.c.l.b16 %v340
    %v583 = vunpack.c.l.b16 %v341
    %v584 = vunpack.c.l.b16 %v342
    %v585 = vunpack.c.l.b16 %v343
    %v586 = vunpack.c.l.b16 %v344
    %v587 = vunpack.c.l.b16 %v345
    %v588 = vunpack.c.l.b16 %v346
    %v589 = vunpack.c.l.b16 %v347
    %v590 = vunpack.c.l.b16 %v348
    %v591 = vunpack.c.l.b16 %v349
    %v592 = vunpack.c.l.b16 %v350
    %v593 = vunpack.c.l.b16 %v351
    %v594 = vunpack.c.l.b16 %v352
    %v595 = vunpack.c.l.b16 %v353
    %v596 = vunpack.c.l.b16 %v354
    %v597 = vunpack.c.l.b16 %v355
    %v598 = vunpack.c.l.b16 %v356
    %v599 = vunpack.c.l.b16 %v357
    %v600 = vunpack.c.l.b16 %v358
    %v601 = vunpack.c.l.b16 %v359
    %v602 = vunpack.c.l.b16 %v360
    %v603 = vunpack.c.l.b16 %v361
    %v604 = vunpack.c.l.b16 %v362
    %v605 = vunpack.c.l.b16 %v363
    %v606 = vunpack.c.l.b16 %v364
    %v607 = vpack.c.b16 %v512, %v511
    %v608 = vpack.c.b16 %v514, %v513
    %v609 = vpack.c.b16 %v516, %v515
    %v610 = vpack.c.b16 %v518, %v517
    %v611 = vpack.c.b16 %v520, %v519
    %v612 = vpack.c.b16 %v522, %v521
    %v613 = vpack.c.b16 %v524, %v523
    %v614 = vpack.c.b16 %v526, %v525
    %v615 = vpack.c.b16 %v528, %v527
    %v616 = vpack.c.b16 %v530, %v529
    %v617 = vpack.c.b16 %v532, %v531
    %v618 = vpack.c.b16 %v534, %v533
    %v619 = vpack.c.b16 %v536, %v535
    %v620 = vpack.c.b16 %v538, %v537
    %v621 = vpack.c.b16 %v540, %v539
    %v622 = vpack.c.b16 %v542, %v541
    %v623 = vpack.c.b16 %v544, %v543
    %v624 = vpack.c.b16 %v546, %v545
    %v625 = vpack.c.b16 %v548, %v547
    %v626 = vpack.c.b16 %v550, %v549
    %v627 = vpack.c.b16 %v552, %v551
    %v628 = vpack.c.b16 %v554, %v553
    %v629 = vpack.c.b16 %v556, %v555
    %v630 = vpack.c.b16 %v558, %v557
    %v631 = vpack.c.b16 %v560, %v559
    %v632 = vpack.c.b16 %v562, %v561
    %v633 = vpack.c.b16 %v564, %v563
    %v634 = vpack.c.b16 %v566, %v565
    %v635 = vpack.c.b16 %v568, %v567
    %v636 = vpack.c.b16 %v570, %v569
    %v637 = vpack.c.b16 %v572, %v571
    %v638 = vpack.c.b16 %v574, %v573
    %v639 = vpack.c.b16 %v576, %v575
    %v640 = vpack.c.b16 %v578, %v577
    %v641 = vpack.c.b16 %v580, %v579
    %v642 = vpack.c.b16 %v582, %v581
    %v643 = vpack.c.b16 %v584, %v583
    %v644 = vpack.c.b16 %v586, %v585
    %v645 = vpack.c.b16 %v588, %v587
    %v646 = vpack.c.b16 %v590, %v589
    %v647 = vpack.c.b16 %v592, %v591
    %v648 = vpack.c.b16 %v594, %v593
    %v649 = vpack.c.b16 %v596, %v595
    %v650 = vpack.c.b16 %v598, %v597
    %v651 = vpack.c.b16 %v600, %v599
    %v652 = vpack.c.b16 %v602, %v601
    %v653 = vpack.c.b16 %v604, %v603
    %v654 = vpack.c.b16 %v606, %v605
    %703 = vmatprep.subr.bf16.mxu0 0
    %704 = vmatpush1.bf16.msra.mxu0 %v607
    %705 = vmatprep.subr.bf16.mxu0 0
    %706 = vmatpush1.bf16.msra.mxu0 %v608
    %707 = vmatprep.subr.bf16.mxu0 0
    %708 = vmatpush1.bf16.msra.mxu0 %v609
    %709 = vmatprep.subr.bf16.mxu0 0
    %710 = vmatpush1.bf16.msra.mxu0 %v610
    %711 = vmatprep.subr.bf16.mxu0 0
    %712 = vmatpush1.bf16.msra.mxu0 %v611
    %713 = vmatprep.subr.bf16.mxu0 0
    %714 = vmatpush1.bf16.msra.mxu0 %v612
    %715 = vmatprep.subr.bf16.mxu0 0
    %716 = vmatpush1.bf16.msra.mxu0 %v613
    %717 = vmatprep.subr.bf16.mxu0 0
    %718 = vmatpush1.bf16.msra.mxu0 %v614
    %719 = vmatprep.subr.bf16.mxu0 0
    %720 = vmatpush1.bf16.msra.mxu0 %v615
    %721 = vmatprep.subr.bf16.mxu0 0
    %722 = vmatpush1.bf16.msra.mxu0 %v616
    %723 = vmatprep.subr.bf16.mxu0 0
    %724 = vmatpush1.bf16.msra.mxu0 %v617
    %725 = vmatprep.subr.bf16.mxu0 0
    %726 = vmatpush1.bf16.msra.mxu0 %v618
    %727 = vmatprep.subr.bf16.mxu0 0
    %728 = vmatpush1.bf16.msra.mxu0 %v619
    %729 = vmatprep.subr.bf16.mxu0 0
    %730 = vmatpush1.bf16.msra.mxu0 %v620
    %731 = vmatprep.subr.bf16.mxu0 0
    %732 = vmatpush1.bf16.msra.mxu0 %v621
    %733 = vmatprep.subr.bf16.mxu0 0
    %734 = vmatpush1.bf16.msra.mxu0 %v622
    %735 = vmatprep.mubr.bf16.mxu0 %v404
    %736 = vmatmul.mubr.bf16.gmra.mrb[0].mxu0 %v403
    %v737 = vpop.f32.mrb[0].mxu0
    %v738 = vadd.f32 %v370, %v737
    %v739 = vpop.f32.mrb[0].mxu0
    %v740 = vpop.f32.mrb[0].mxu0
    %v741 = vpop.f32.mrb[0].mxu0
    %742 = vdwg.mxu0
    %743 = vmatprep.subr.bf16.mxu0 0
    %744 = vmatpush1.bf16.msra.mxu0 %v623
    %745 = vmatprep.subr.bf16.mxu0 0
    %746 = vmatpush1.bf16.msra.mxu0 %v624
    %747 = vmatprep.subr.bf16.mxu0 0
    %748 = vmatpush1.bf16.msra.mxu0 %v625
    %749 = vmatprep.subr.bf16.mxu0 0
    %750 = vmatpush1.bf16.msra.mxu0 %v626
    %751 = vmatprep.subr.bf16.mxu0 0
    %752 = vmatpush1.bf16.msra.mxu0 %v627
    %753 = vmatprep.subr.bf16.mxu0 0
    %754 = vmatpush1.bf16.msra.mxu0 %v628
    %755 = vmatprep.subr.bf16.mxu0 0
    %756 = vmatpush1.bf16.msra.mxu0 %v629
    %757 = vmatprep.subr.bf16.mxu0 0
    %758 = vmatpush1.bf16.msra.mxu0 %v630
    %759 = vmatprep.subr.bf16.mxu0 0
    %760 = vmatpush1.bf16.msra.mxu0 %v631
    %761 = vmatprep.subr.bf16.mxu0 0
    %762 = vmatpush1.bf16.msra.mxu0 %v632
    %763 = vmatprep.subr.bf16.mxu0 0
    %764 = vmatpush1.bf16.msra.mxu0 %v633
    %765 = vmatprep.subr.bf16.mxu0 0
    %766 = vmatpush1.bf16.msra.mxu0 %v634
    %767 = vmatprep.subr.bf16.mxu0 0
    %768 = vmatpush1.bf16.msra.mxu0 %v635
    %769 = vmatprep.subr.bf16.mxu0 0
    %770 = vmatpush1.bf16.msra.mxu0 %v636
    %771 = vmatprep.subr.bf16.mxu0 0
    %772 = vmatpush1.bf16.msra.mxu0 %v637
    %773 = vmatprep.subr.bf16.mxu0 0
    %774 = vmatpush1.bf16.msra.mxu0 %v638
    %775 = vmatprep.mubr.bf16.mxu0 %v406
    %776 = vmatmul.mubr.bf16.gmra.mrb[0].mxu0 %v405
    %v777 = vpop.f32.mrb[0].mxu0
    %v778 = vadd.f32 %v738, %v777
    %v779 = vpop.f32.mrb[0].mxu0
    %v780 = vpop.f32.mrb[0].mxu0
    %v781 = vpop.f32.mrb[0].mxu0
    %782 = vdwg.mxu0
    %783 = vmatprep.subr.bf16.mxu0 0
    %784 = vmatpush1.bf16.msra.mxu0 %v639
    %785 = vmatprep.subr.bf16.mxu0 0
    %786 = vmatpush1.bf16.msra.mxu0 %v640
    %787 = vmatprep.subr.bf16.mxu0 0
    %788 = vmatpush1.bf16.msra.mxu0 %v641
    %789 = vmatprep.subr.bf16.mxu0 0
    %790 = vmatpush1.bf16.msra.mxu0 %v642
    %791 = vmatprep.subr.bf16.mxu0 0
    %792 = vmatpush1.bf16.msra.mxu0 %v643
    %793 = vmatprep.subr.bf16.mxu0 0
    %794 = vmatpush1.bf16.msra.mxu0 %v644
    %795 = vmatprep.subr.bf16.mxu0 0
    %796 = vmatpush1.bf16.msra.mxu0 %v645
    %797 = vmatprep.subr.bf16.mxu0 0
    %798 = vmatpush1.bf16.msra.mxu0 %v646
    %799 = vmatprep.subr.bf16.mxu0 0
    %800 = vmatpush1.bf16.msra.mxu0 %v647
    %801 = vmatprep.subr.bf16.mxu0 0
    %802 = vmatpush1.bf16.msra.mxu0 %v648
    %803 = vmatprep.subr.bf16.mxu0 0
    %804 = vmatpush1.bf16.msra.mxu0 %v649
    %805 = vmatprep.subr.bf16.mxu0 0
    %806 = vmatpush1.bf16.msra.mxu0 %v650
    %807 = vmatprep.subr.bf16.mxu0 0
    %808 = vmatpush1.bf16.msra.mxu0 %v651
    %809 = vmatprep.subr.bf16.mxu0 0
    %810 = vmatpush1.bf16.msra.mxu0 %v652
    %811 = vmatprep.subr.bf16.mxu0 0
    %812 = vmatpush1.bf16.msra.mxu0 %v653
    %813 = vmatprep.subr.bf16.mxu0 0
    %814 = vmatpush1.bf16.msra.mxu0 %v654
    %815 = vmatprep.mubr.bf16.mxu0 %v408
    %816 = vmatmul.mubr.bf16.gmra.mrb[0].mxu0 %v407
    %v817 = vpop.f32.mrb[0].mxu0
    %v818 = vadd.f32 %v778, %v817
    %v819 = vpop.f32.mrb[0].mxu0
    %v820 = vpop.f32.mrb[0].mxu0
    %v821 = vpop.f32.mrb[0].mxu0
    %822 = vdwg.mxu0
    %823 = vst [vmem:[#allocation2] sm:$0x3] %v818
    // Predicated region
    $region14: #{tpu_custom_call.1} parent=1 // pred_check
      _
    $region15: #{tpu_custom_call.1} parent=1 // pred_check_branch
      %825 = sbr.rel (0) target = $region17
    $region16: #{tpu_custom_call.1} parent=1 // pred_region
      %s827 = ssub.s32 32, 32
      %828 = vsyncadd [#allocation3], %s827
      %s830 = sshll.u32 [#allocation2], 4
      %s831 = int_to_ptr.vmem [resolvable:$true] %s830
      %833 = dma.vmem_to_hbm [thread:$0]  %s831, 32, %s3, [#allocation3]
    $region17: #{tpu_custom_call.1} parent=1 // pred_fallthru
      _
    // Predicated region
    $region18: #{tpu_custom_call.1} parent=1 // pred_check
      _
    $region19: #{tpu_custom_call.1} parent=1 // pred_check_branch
      %835 = sbr.rel (0) target = $region21
    $region20: #{tpu_custom_call.1} parent=1 // pred_region
      %836 = dma.done [#allocation3], 32
    $region21: #{tpu_custom_call.1} parent=1 // pred_fallthru
      _
    %837 = vsyncpa [#allocation3], 1

</llo_original>
